<compile_context>
chip_gen: v5e
topology: v5e:2x2
jax: 0.10.0
libtpu: 0.0.40
codegen_flags: <defaults>
</compile_context>

<pallas_src>
import jax
import jax.numpy as jnp
from jax.experimental import pallas as pl
from jax.experimental.pallas import tpu as pltpu

_LANES = 512      # output lane width (multiple of 128 -> unmasked stores)
_BLOCK_R = 1024   # rows per grid step: 1024*512*4B = 2 MiB per array tile


def _round_up(n: int, m: int) -> int:
    return ((n + m - 1) // m) * m


def _fused_kernel(params_ref, c0_ref, c1_ref, o_ref):
    # params_ref: SMEM f32[3] = [w0, w1, b]
    # c0_ref/c1_ref: VMEM f32[block_r, _LANES]  (dense slabs of column 0 / 1)
    # o_ref:         VMEM f32[block_r, _LANES]
    w0 = params_ref[0]
    w1 = params_ref[1]
    b = params_ref[2]

    # Two scalar-vector FMAs on the VPU; log/exp on the EUP (separate slot).
    u = w0 * jnp.log(c0_ref[...]) + w1 * jnp.log(c1_ref[...]) + b
    o_ref[...] = jnp.exp(jnp.exp(u))


def test_modle_forward(x, weight, bias):
    """x: [N, 2] f32, weight: [1, 2], bias: [1]  ->  [N, 1] f32."""
    n = x.shape[0]

    # Choose a dense 2-D slab shape [rows, _LANES]:
    #  - rows multiple of 8 (sublane tiling),
    #  - if tiled over the grid, rows multiple of _BLOCK_R.
    rows = _round_up(max(-(-n // _LANES), 1), 8)
    if rows > _BLOCK_R:
        rows = _round_up(rows, _BLOCK_R)
        block_r = _BLOCK_R
    else:
        block_r = rows
    elems = rows * _LANES

    # Layout plumbing in the wrapper (not compute): split columns, pad with
    # 1.0 so log(pad) = 0 and the tail stays finite, reshape to dense slabs.
    col0 = x[:, 0]
    col1 = x[:, 1]
    pad = elems - n
    if pad:
        col0 = jnp.pad(col0, (0, pad), constant_values=1.0)
        col1 = jnp.pad(col1, (0, pad), constant_values=1.0)
    c0 = col0.reshape(rows, _LANES)
    c1 = col1.reshape(rows, _LANES)

    params = jnp.concatenate(
        [weight.reshape(-1), bias.reshape(-1)]
    ).astype(jnp.float32)                          # [3] -> SMEM scalars

    grid = (rows // block_r,)
    out_slab = pl.pallas_call(
        _fused_kernel,
        out_shape=jax.ShapeDtypeStruct((rows, _LANES), x.dtype),
        grid=grid,
        in_specs=[
            pl.BlockSpec(memory_space=pltpu.MemorySpace.SMEM),       # params
            pl.BlockSpec((block_r, _LANES), lambda i: (i, 0)),       # col 0
            pl.BlockSpec((block_r, _LANES), lambda i: (i, 0)),       # col 1
        ],
        out_specs=pl.BlockSpec((block_r, _LANES), lambda i: (i, 0)),
        compiler_params=pltpu.CompilerParams(
            dimension_semantics=("parallel",),
        ),
        cost_estimate=pl.CostEstimate(
            flops=4 * elems,            # 2 mul + 2 add per element
            transcendentals=4 * elems,  # 2 log + 2 exp per element
            bytes_accessed=12 * elems,  # 2x f32 read + 1x f32 write
        ),
    )(params, c0, c1)

    # Back to PyTorch's [N, 1] convention (cheap wrapper-side reshape).
    return out_slab.reshape(-1)[:n].reshape(n, 1)


if __name__ == "__main__":
    key = jax.random.PRNGKey(0)
    kx, kw, kb = jax.random.split(key, 3)

    # Small batch; inputs must be positive (torch.log in the forward pass).
    N = 8
    x = jax.random.uniform(kx, (N, 2), dtype=jnp.float32, minval=0.5, maxval=2.0)

    # nn.Linear(2, 1): weight [1, 2], bias [1].
    weight = jax.random.uniform(kw, (1, 2), dtype=jnp.float32, minval=-0.5, maxval=0.5)
    bias = jax.random.uniform(kb, (1,), dtype=jnp.float32, minval=-0.5, maxval=0.5)

    out = test_modle_forward(x, weight, bias)
    jax.block_until_ready(out)

    # Reference check in plain JAX (same math as the PyTorch module).
    ref = jnp.exp(jnp.exp(jnp.log(x) @ weight.T + bias))
    assert out.shape == (N, 1)
    assert jnp.allclose(out, ref, rtol=1e-5, atol=1e-5)

    print("KERNEL_OK")
</pallas_src>

<mosaic_0001>
module attributes {stable_mosaic.version = 11 : i64} {
  func.func @_fused_kernel(%arg0: i32, %arg1: memref<3xf32, #tpu.memory_space<smem>>, %arg2: memref<8x512xf32, #tpu.memory_space<vmem>>, %arg3: memref<8x512xf32, #tpu.memory_space<vmem>>, %arg4: memref<8x512xf32, #tpu.memory_space<vmem>>) attributes {dimension_semantics = [#tpu.dimension_semantics<parallel>], iteration_bounds = array<i64: 1>, scalar_prefetch = 0 : i64, scratch_operands = 0 : i64, tpu.core_type = #tpu.core_type<tc>, window_params = [{transform_indices = @transform_0, window_bounds = array<i64: 3>}, {transform_indices = @transform_1, window_bounds = array<i64: 8, 512>}, {transform_indices = @transform_2, window_bounds = array<i64: 8, 512>}, {transform_indices = @transform_3, window_bounds = array<i64: 8, 512>}]} {
    %c0 = arith.constant 0 : index
    %0 = memref.load %arg1[%c0] : memref<3xf32, #tpu.memory_space<smem>>
    %c1 = arith.constant 1 : index
    %1 = memref.load %arg1[%c1] : memref<3xf32, #tpu.memory_space<smem>>
    %c2 = arith.constant 2 : index
    %2 = memref.load %arg1[%c2] : memref<3xf32, #tpu.memory_space<smem>>
    %c0_0 = arith.constant 0 : index
    %c0_1 = arith.constant 0 : index
    %3 = vector.load %arg2[%c0_0, %c0_1] : memref<8x512xf32, #tpu.memory_space<vmem>>, vector<8x512xf32>
    %4 = math.log %3 : vector<8x512xf32>
    %5 = vector.broadcast %0 : f32 to vector<8x512xf32>
    %6 = arith.mulf %5, %4 : vector<8x512xf32>
    %c0_2 = arith.constant 0 : index
    %c0_3 = arith.constant 0 : index
    %7 = vector.load %arg3[%c0_2, %c0_3] : memref<8x512xf32, #tpu.memory_space<vmem>>, vector<8x512xf32>
    %8 = math.log %7 : vector<8x512xf32>
    %9 = vector.broadcast %1 : f32 to vector<8x512xf32>
    %10 = arith.mulf %9, %8 : vector<8x512xf32>
    %11 = arith.addf %6, %10 : vector<8x512xf32>
    %12 = vector.broadcast %2 : f32 to vector<8x512xf32>
    %13 = arith.addf %11, %12 : vector<8x512xf32>
    %14 = math.exp %13 : vector<8x512xf32>
    %15 = math.exp %14 : vector<8x512xf32>
    %c0_4 = arith.constant 0 : index
    %c0_5 = arith.constant 0 : index
    %16 = vector.load %arg4[%c0_4, %c0_5] : memref<8x512xf32, #tpu.memory_space<vmem>>, vector<8x512xf32>
    tpu.vector_store %arg4[%c0_4, %c0_5], %15 {strides = array<i32>} : memref<8x512xf32, #tpu.memory_space<vmem>>, vector<8x512xf32>,
    return
  }
  func.func @transform_0(%arg0: i32) -> i32 {
    %c0_i32 = arith.constant 0 : i32
    %c0_i32_0 = arith.constant 0 : i32
    return %c0_i32 : i32
  }
  func.func @transform_1(%arg0: i32) -> (i32, i32) {
    %c0_i32 = arith.constant 0 : i32
    %c0_i32_0 = arith.constant 0 : i32
    return %arg0, %c0_i32 : i32, i32
  }
  func.func @transform_2(%arg0: i32) -> (i32, i32) {
    %c0_i32 = arith.constant 0 : i32
    %c0_i32_0 = arith.constant 0 : i32
    return %arg0, %c0_i32 : i32, i32
  }
  func.func @transform_3(%arg0: i32) -> (i32, i32) {
    %c0_i32 = arith.constant 0 : i32
    %c0_i32_0 = arith.constant 0 : i32
    return %arg0, %c0_i32 : i32, i32
  }
}

</mosaic_0001>

<llo_original>
// kernel: tpu_custom_call.1
$region0: #{tpu_custom_call.1}
  #allocation0 [shape = 'u32[]', space=smem, size = 0x4, offset = 0x4, fixed_abs, tag = 'smem constant byte address 0x4 - core index']
  #allocation1 [shape = 'u32[72,128]{1,0:T(1,128)}', space=vmem, size = 0x9000, scoped, tag = 'internal scratch']
  %s0 = inlined_call_operand.hbm [shape: f32[3], index: 0, kind: input, shape index: {}]
  %s1 = inlined_call_operand.hbm [shape: f32[8,512], index: 1, kind: input, shape index: {}]
  %s2 = inlined_call_operand.hbm [shape: f32[8,512], index: 2, kind: input, shape index: {}]
  %s3 = inlined_call_operand.hbm [shape: f32[8,512], index: 3, kind: output, shape index: {}]
  %s4 = sld [smem:[#allocation0]]
  $region34: #{tpu_custom_call.1} parent=0
    _
  %s6 = ssub.s32 1, %s4
  %s7 = scalar_select 0, %s6, %s4
  $region1: #{tpu_custom_call.1} parent=0
    #allocation2 [shape = 'u8[512]{0}', space=smem, size = 0x200, scoped, tag = 'input window, operand 0, single buffered']
    #allocation3 [shape = 's32[1]{0}', space=sflag, size = 0x4, scoped, tag = 'scoped memory for tpu_custom_call.1']
    #allocation4 [shape = 's32[1]{0}', space=sflag, size = 0x4, scoped, tag = 'scoped memory for tpu_custom_call.1']
    #allocation5 [shape = 's32[1]{0}', space=sflag, size = 0x4, scoped, tag = 'scoped memory for tpu_custom_call.1']
    #allocation6 [shape = 'u8[16384]{0}', space=vmem, size = 0x4000, scoped, tag = 'input window, operand 1, single buffered']
    #allocation7 [shape = 'u8[16384]{0}', space=vmem, size = 0x4000, scoped, tag = 'input window, operand 2, single buffered']
    #allocation8 [shape = 's32[1]{0}', space=sflag, size = 0x4, scoped, tag = 'scoped memory for tpu_custom_call.1']
    #allocation9 [shape = 'u8[16384]{0}', space=vmem, size = 0x4000, scoped, tag = 'output window, operand 0, single buffered']
    %8 = vsyncpa [#allocation5], 0
    %9 = vsyncpa [#allocation3], 0
    %10 = vsyncpa [#allocation8], 0
    %11 = vsyncpa [#allocation4], 0
    // Predicated region
    $region2: #{tpu_custom_call.1} parent=1 // pred_check
      _
    $region3: #{tpu_custom_call.1} parent=1 // pred_check_branch
      %13 = sbr.rel (0) target = $region5
    $region4: #{tpu_custom_call.1} parent=1 // pred_region
      %15 = vsyncadd [#allocation5], 0
      %s17 = sshll.u32 %s0, 4
      %s18 = int_to_ptr.hbm [resolvable:$true] %s17
      %20 = dma.hbm_to_smem %s18, 16, [#allocation2], [#allocation5]
    $region5: #{tpu_custom_call.1} parent=1 // pred_fallthru
      _
    // Predicated region
    $region6: #{tpu_custom_call.1} parent=1 // pred_check
      _
    $region7: #{tpu_custom_call.1} parent=1 // pred_check_branch
      %22 = sbr.rel (0) target = $region9
    $region8: #{tpu_custom_call.1} parent=1 // pred_region
      %24 = vsyncadd [#allocation3], 0
      %s26 = sshll.u32 %s1, 4
      %s27 = int_to_ptr.hbm [resolvable:$true] %s26
      %s28 = sshll.u32 [#allocation6], 4
      %s29 = int_to_ptr.vmem [resolvable:$true] %s28
      %31 = dma.hbm_to_vmem [thread:$0]  %s27, 512, %s29, [#allocation3]
    $region9: #{tpu_custom_call.1} parent=1 // pred_fallthru
      _
    // Predicated region
    $region10: #{tpu_custom_call.1} parent=1 // pred_check
      _
    $region11: #{tpu_custom_call.1} parent=1 // pred_check_branch
      %33 = sbr.rel (0) target = $region13
    $region12: #{tpu_custom_call.1} parent=1 // pred_region
      %35 = vsyncadd [#allocation8], 0
      %s37 = sshll.u32 %s2, 4
      %s38 = int_to_ptr.hbm [resolvable:$true] %s37
      %s39 = sshll.u32 [#allocation7], 4
      %s40 = int_to_ptr.vmem [resolvable:$true] %s39
      %42 = dma.hbm_to_vmem [thread:$0]  %s38, 512, %s40, [#allocation8]
    $region13: #{tpu_custom_call.1} parent=1 // pred_fallthru
      _
    // Predicated region
    $region14: #{tpu_custom_call.1} parent=1 // pred_check
      _
    $region15: #{tpu_custom_call.1} parent=1 // pred_check_branch
      %44 = sbr.rel (0) target = $region17
    $region16: #{tpu_custom_call.1} parent=1 // pred_region
      %46 = dma.done [#allocation5], 16
    $region17: #{tpu_custom_call.1} parent=1 // pred_fallthru
      _
    // Predicated region
    $region18: #{tpu_custom_call.1} parent=1 // pred_check
      _
    $region19: #{tpu_custom_call.1} parent=1 // pred_check_branch
      %48 = sbr.rel (0) target = $region21
    $region20: #{tpu_custom_call.1} parent=1 // pred_region
      %50 = dma.done [#allocation3], 512
    $region21: #{tpu_custom_call.1} parent=1 // pred_fallthru
      _
    // Predicated region
    $region22: #{tpu_custom_call.1} parent=1 // pred_check
      _
    $region23: #{tpu_custom_call.1} parent=1 // pred_check_branch
      %52 = sbr.rel (0) target = $region25
    $region24: #{tpu_custom_call.1} parent=1 // pred_region
      %54 = dma.done [#allocation8], 512
    $region25: #{tpu_custom_call.1} parent=1 // pred_fallthru
      _
    %55 = sfence
    %s56 = sld [smem:[#allocation2]]
    %s57 = sld [smem:[#allocation2 + $0x1]]
    %s58 = sld [smem:[#allocation2 + $0x2]]
    %v59 = vld [vmem:[#allocation6] sm:$0xff]
    %v60 = vld [vmem:[#allocation6 + $0x8] sm:$0xff]
    %v61 = vld [vmem:[#allocation6 + $0x10] sm:$0xff]
    %v62 = vld [vmem:[#allocation6 + $0x18] sm:$0xff]
    %v63 = vlog2.pop %v59
    %v64 = vmul.f32 %v63, 0.6931472
    %v65 = vlog2.pop %v60
    %v66 = vmul.f32 %v65, 0.6931472
    %v67 = vlog2.pop %v61
    %v68 = vmul.f32 %v67, 0.6931472
    %v69 = vlog2.pop %v62
    %v70 = vmul.f32 %v69, 0.6931472
    %v71 = vstv %s56
    %v72 = vmul.f32 %v71, %v64
    %v73 = vmul.f32 %v71, %v66
    %v74 = vmul.f32 %v71, %v68
    %v75 = vmul.f32 %v71, %v70
    %v76 = vld [vmem:[#allocation7] sm:$0xff]
    %v77 = vld [vmem:[#allocation7 + $0x8] sm:$0xff]
    %v78 = vld [vmem:[#allocation7 + $0x10] sm:$0xff]
    %v79 = vld [vmem:[#allocation7 + $0x18] sm:$0xff]
    %v80 = vlog2.pop %v76
    %v81 = vmul.f32 %v80, 0.6931472
    %v82 = vlog2.pop %v77
    %v83 = vmul.f32 %v82, 0.6931472
    %v84 = vlog2.pop %v78
    %v85 = vmul.f32 %v84, 0.6931472
    %v86 = vlog2.pop %v79
    %v87 = vmul.f32 %v86, 0.6931472
    %v88 = vstv %s57
    %v89 = vmul.f32 %v88, %v81
    %v90 = vmul.f32 %v88, %v83
    %v91 = vmul.f32 %v88, %v85
    %v92 = vmul.f32 %v88, %v87
    %v93 = vadd.f32 %v72, %v89
    %v94 = vadd.f32 %v73, %v90
    %v95 = vadd.f32 %v74, %v91
    %v96 = vadd.f32 %v75, %v92
    %v97 = vstv %s58
    %v98 = vadd.f32 %v93, %v97
    %v99 = vadd.f32 %v94, %v97
    %v100 = vadd.f32 %v95, %v97
    %v101 = vadd.f32 %v96, %v97
    %v102 = vmul.f32 %v98, 1.442695
    %v103 = vpow.pop %v102
    %v104 = vmul.f32 %v99, 1.442695
    %v105 = vpow.pop %v104
    %v106 = vmul.f32 %v100, 1.442695
    %v107 = vpow.pop %v106
    %v108 = vmul.f32 %v101, 1.442695
    %v109 = vpow.pop %v108
    %v110 = vmul.f32 %v103, 1.442695
    %v111 = vpow.pop %v110
    %v112 = vmul.f32 %v105, 1.442695
    %v113 = vpow.pop %v112
    %v114 = vmul.f32 %v107, 1.442695
    %v115 = vpow.pop %v114
    %v116 = vmul.f32 %v109, 1.442695
    %v117 = vpow.pop %v116
    %118 = vst [vmem:[#allocation9] sm:$0xff] %v111
    %119 = vst [vmem:[#allocation9 + $0x8] sm:$0xff] %v113
    %120 = vst [vmem:[#allocation9 + $0x10] sm:$0xff] %v115
    %121 = vst [vmem:[#allocation9 + $0x18] sm:$0xff] %v117
    // Predicated region
    $region26: #{tpu_custom_call.1} parent=1 // pred_check
      _
    $region27: #{tpu_custom_call.1} parent=1 // pred_check_branch
      %123 = sbr.rel (0) target = $region29
    $region28: #{tpu_custom_call.1} parent=1 // pred_region
      %125 = vsyncadd [#allocation4], 0
      %s127 = sshll.u32 [#allocation9], 4
      %s128 = int_to_ptr.vmem [resolvable:$true] %s127
      %s129 = sshll.u32 %s3, 4
      %s130 = int_to_ptr.hbm [resolvable:$true] %s129
      %132 = dma.vmem_to_hbm [thread:$0]  %s128, 512, %s130, [#allocation4]
    $region29: #{tpu_custom_call.1} parent=1 // pred_fallthru
      _
    // Predicated region
    $region30: #{tpu_custom_call.1} parent=1 // pred_check
      _
    $region31: #{tpu_custom_call.1} parent=1 // pred_check_branch
      %134 = sbr.rel (0) target = $region33
    $region32: #{tpu_custom_call.1} parent=1 // pred_region
      %136 = dma.done [#allocation4], 512
    $region33: #{tpu_custom_call.1} parent=1 // pred_fallthru
      _
    %137 = vsyncpa [#allocation3], 1
    %138 = vsyncpa [#allocation8], 1
    %139 = vsyncpa [#allocation4], 1
    %140 = vsyncpa [#allocation5], 1

</llo_original>
